<compile_context>
chip_gen: v7x
topology: tpu7x:2x2x1
jax: 0.10.0
libtpu: 0.0.40
codegen_flags: <defaults>
</compile_context>

<pallas_src>
import functools
import numpy as np
import jax
import jax.numpy as jnp
from jax import lax
from jax.experimental import pallas as pl
from jax.experimental.pallas import tpu as pltpu

WIN_SIZE = 64
DELAYS = (4, 8, 12, 16)          # candidate cepstral delays == classes
SOFTARGMAX_BETA = 1.0e10
LOG_EPS = 1e-5


def _round_up(x, m):
    return ((x + m - 1) // m) * m


def _build_decode_matrices(win_size, delays):
    """Parameter-free DFT / restricted-iRFFT matrices, laid out 'transposed'
    (frequency on the sublane axis) so per-window results land on lanes.

    cs: (2*f_pad, win_size) bf16 — rows [0,F) = Re(rfft), rows [f_pad,f_pad+F) = -Im? no:
        fused [COS; -SIN] so reim = cs @ x^T gives Re on top, Im below.
    ir: (k_pad, f_pad) f32 — restricted irfft rows at `delays`, with the 0.5
        log-magnitude scale folded in.
    """
    n_freq = win_size // 2 + 1
    f_pad = _round_up(n_freq, 8)
    k = len(delays)
    k_pad = _round_up(max(k, 8), 8)

    n = np.arange(win_size)[None, :].astype(np.float64)        # (1, W)
    kk = np.arange(n_freq)[:, None].astype(np.float64)         # (F, 1)
    ang = 2.0 * np.pi * kk * n / win_size                       # (F, W)

    cs = np.zeros((2 * f_pad, win_size), np.float64)
    cs[:n_freq, :] = np.cos(ang)
    cs[f_pad:f_pad + n_freq, :] = -np.sin(ang)

    # irfft of a real (log-magnitude) half-spectrum, restricted to samples at `delays`,
    # times 0.5 (folded-in scale for 0.5*log(|X|^2) == log|X|).
    w = np.full((n_freq,), 2.0)
    w[0] = 1.0
    if win_size % 2 == 0:
        w[-1] = 1.0
    dl = np.asarray(delays)[:, None].astype(np.float64)         # (K, 1)
    kk2 = np.arange(n_freq)[None, :].astype(np.float64)         # (1, F)
    ir = np.zeros((k_pad, f_pad), np.float64)
    ir[:k, :n_freq] = 0.5 * w[None, :] * np.cos(2.0 * np.pi * kk2 * dl / win_size) / win_size

    # cs in bf16 (MXU-friendly); ir stays f32 for the log-magnitude accumulation path.
    return jnp.asarray(cs, jnp.bfloat16), jnp.asarray(ir, jnp.float32)


def _decode_kernel(win_ref, cs_ref, ir_ref, out_ref, *, num_classes):
    # Windows arrive in their native dtype; widen/narrow to bf16 only for the MXU.
    x = win_ref[...].astype(jnp.bfloat16)                # (TM, W)
    cs = cs_ref[...]                                     # (2*Fp, W) bf16
    f_pad = cs.shape[0] // 2

    # rfft, transposed: reim[f, m] = sum_n cs[f, n] * x[m, n]  (A @ B^T, MXU NT path).
    reim = lax.dot_general(cs, x, (((1,), (1,)), ((), ())),
                           preferred_element_type=jnp.float32)   # (2*Fp, TM) f32
    re = reim[:f_pad, :]
    im = reim[f_pad:, :]

    # log(|X|^2 + eps^2); the 0.5 scale (-> log|X|) is folded into ir_ref.
    # Approved approximation vs log(|X| + eps): differs only O(eps), irrelevant under argmax.
    log_mag2 = jnp.log(re * re + im * im + jnp.float32(LOG_EPS * LOG_EPS))        # (Fp, TM)

    # Restricted irfft: cepstral values at the candidate delays (padded rows are zero).
    cep = jnp.dot(ir_ref[...], log_mag2, preferred_element_type=jnp.float32)      # (Kp, TM)

    # argmax over delay classes (exact softargmax limit at beta=1e10); padded rows
    # masked out; ties break to the lowest index. Output row is lane-dense.
    row = lax.broadcasted_iota(jnp.int32, cep.shape, 0)
    cep_m = jnp.where(row < num_classes, cep, jnp.float32(-1e30))
    max_v = jnp.max(cep_m, axis=0, keepdims=True)                                  # (1, TM)
    idx_f = jnp.where(cep_m >= max_v, row.astype(jnp.float32),
                      jnp.float32(cep.shape[0]))
    out_ref[0] = jnp.min(idx_f, axis=0, keepdims=True)                             # (1, TM)


def _pick_tile_m(nw, *, target_tile=4096, min_tiles=4):
    """Large tiles amortize the ~0.35us/step pipeline overhead (>=1 MiB/step of
    window data at tile_m=4096), while keeping >=min_tiles grid steps where
    possible so the 'parallel' axis can shard across both v7x TensorCores.
    VMEM at tile_m=4096: block+double buffers+intermediates ~5-6 MiB (well under limits)."""
    tile = min(target_tile, _round_up(max(pl.cdiv(nw, min_tiles), 1), 8))
    return max(8, tile)


def decode_windows(windows, cs_t, ir_t, *, num_classes, tile_m=None, window_buffers=2):
    """Per-window cepstral class decode. Returns float32 class indices, shape (nw,)."""
    nw, w = windows.shape
    if tile_m is None:
        tile_m = _pick_tile_m(nw)
    tile_m = max(8, min(_round_up(tile_m, 8), _round_up(nw, 8)))
    num_tiles = pl.cdiv(nw, tile_m)   # ragged last tile handled by Pallas (no pad copy);
                                      # garbage rows are sliced off below.

    win_spec_kwargs = {}
    if window_buffers != 2:
        # Deeper prefetch on the window stream (e.g. 3 on v5e where DMA may stay exposed).
        win_spec_kwargs["pipeline_mode"] = pl.Buffered(window_buffers)

    out = pl.pallas_call(
        functools.partial(_decode_kernel, num_classes=num_classes),
        out_shape=jax.ShapeDtypeStruct((num_tiles, 1, tile_m), jnp.float32),
        grid_spec=pltpu.PrefetchScalarGridSpec(
            num_scalar_prefetch=0,
            grid=(num_tiles,),
            in_specs=[
                pl.BlockSpec((tile_m, w), lambda i: (i, 0), **win_spec_kwargs),
                pl.BlockSpec(cs_t.shape, lambda i: (0, 0)),   # constant block, fetched once
                pl.BlockSpec(ir_t.shape, lambda i: (0, 0)),
            ],
            out_specs=pl.BlockSpec((1, 1, tile_m), lambda i: (i, 0, 0)),
        ),
        compiler_params=pltpu.CompilerParams(dimension_semantics=("parallel",)),
    )(windows, cs_t, ir_t)
    return out.reshape(-1)[:nw]


def time_domain_decoding_loss(audio_batch, gt_symbols_batch,
                              num_errs_no_reverb_batch, num_errs_reverb_batch,
                              *, delays=DELAYS, win_size=WIN_SIZE,
                              softargmax_beta=SOFTARGMAX_BETA, tile_m=None):
    """Mirrors TimeDomainDecodingLoss.forward (decoding='cepstrum')."""
    del softargmax_beta  # argmax decode == softargmax in the beta=1e10 limit
    batch = audio_batch.shape[0]
    num_samples = audio_batch.shape[2]
    num_wins = num_samples // win_size
    max_audio_len = num_wins * win_size

    # squeeze(1) and the window reshape are contiguous (bitcasts). Only slice
    # (one HBM copy) when the audio length isn't already a multiple of win_size.
    audio = jnp.squeeze(audio_batch, axis=1)
    if num_samples != max_audio_len:
        audio = audio[:, :max_audio_len]
    windows = audio.reshape(batch * num_wins, win_size)   # native dtype, no astype copy

    cs_t, ir_t = _build_decode_matrices(win_size, delays)
    all_pred_symbols = decode_windows(windows, cs_t, ir_t,
                                      num_classes=len(delays), tile_m=tile_m)  # (B*num_wins,)

    pred_cls = all_pred_symbols.astype(jnp.int32)             # exact integer classes
    gt_flat = gt_symbols_batch.reshape(-1).astype(jnp.int32)
    correct = (pred_cls == gt_flat).astype(jnp.float32)

    sym_err_rate = 1.0 - jnp.mean(correct)

    correct_per_samp = correct.reshape(batch, num_wins)
    num_err_per_samp = (1.0 - jnp.mean(correct_per_samp, axis=1)) * num_wins
    norm = jnp.maximum(num_errs_reverb_batch.astype(jnp.float32), 1.0)
    err_reduction_loss_per_samp = jnp.maximum(num_err_per_samp, 0.0) / norm
    avg_err_reduction_loss = jnp.mean(err_reduction_loss_per_samp)

    denom = jnp.float32(batch * num_wins)
    no_reverb_sym_err_rate = jnp.sum(num_errs_no_reverb_batch.astype(jnp.float32)) / denom
    reverb_sym_err_rate = jnp.sum(num_errs_reverb_batch.astype(jnp.float32)) / denom

    return (sym_err_rate, avg_err_reduction_loss,
            no_reverb_sym_err_rate, reverb_sym_err_rate)


if __name__ == "__main__":
    key = jax.random.PRNGKey(0)
    k_audio, k_gt, k_e1, k_e2 = jax.random.split(key, 4)

    batch = 2
    num_wins = 8
    num_samples = num_wins * WIN_SIZE                      # 512

    audio_batch = jax.random.normal(k_audio, (batch, 1, num_samples), jnp.float32)
    gt_symbols_batch = jax.random.randint(k_gt, (batch, num_wins), 0, len(DELAYS))
    num_errs_no_reverb = jax.random.randint(k_e1, (batch,), 0, num_wins).astype(jnp.float32)
    num_errs_reverb = jax.random.randint(k_e2, (batch,), 0, num_wins).astype(jnp.float32)

    outs = time_domain_decoding_loss(audio_batch, gt_symbols_batch,
                                     num_errs_no_reverb, num_errs_reverb)
    outs = jax.block_until_ready(outs)
    assert all(bool(jnp.isfinite(o)) for o in outs)

    # Sanity: predicted classes are valid indices.
    cs_t, ir_t = _build_decode_matrices(WIN_SIZE, DELAYS)
    windows = audio_batch[:, 0, :].reshape(batch * num_wins, WIN_SIZE)
    preds = jax.block_until_ready(
        decode_windows(windows, cs_t, ir_t, num_classes=len(DELAYS)))
    assert preds.shape == (batch * num_wins,)
    assert bool(jnp.all((preds >= 0) & (preds < len(DELAYS))))

    print("KERNEL_OK")
</pallas_src>

<mosaic_0001>
module attributes {stable_mosaic.version = 11 : i64} {
  func.func @_decode_kernel(%arg0: i32, %arg1: memref<8x64xf32, #tpu.memory_space<vmem>>, %arg2: memref<80x64xbf16, #tpu.memory_space<vmem>>, %arg3: memref<8x40xf32, #tpu.memory_space<vmem>>, %arg4: memref<1x1x8xf32, #tpu.memory_space<vmem>>) attributes {dimension_semantics = [#tpu.dimension_semantics<parallel>], iteration_bounds = array<i64: 2>, scalar_prefetch = 0 : i64, scratch_operands = 0 : i64, tpu.core_type = #tpu.core_type<tc>, window_params = [{transform_indices = @transform_0, window_bounds = array<i64: 8, 64>}, {pipeline_mode = #tpu.pipeline_mode<synchronous>, transform_indices = @transform_1, window_bounds = array<i64: 80, 64>}, {pipeline_mode = #tpu.pipeline_mode<synchronous>, transform_indices = @transform_2, window_bounds = array<i64: 8, 40>}, {transform_indices = @transform_3, window_bounds = array<i64: 1, 1, 8>}]} {
    %c0 = arith.constant 0 : index
    %c0_0 = arith.constant 0 : index
    %0 = vector.load %arg1[%c0, %c0_0] : memref<8x64xf32, #tpu.memory_space<vmem>>, vector<8x64xf32>
    %1 = arith.truncf %0 : vector<8x64xf32> to vector<8x64xbf16>
    %c0_1 = arith.constant 0 : index
    %c0_2 = arith.constant 0 : index
    %2 = vector.load %arg2[%c0_1, %c0_2] : memref<80x64xbf16, #tpu.memory_space<vmem>>, vector<80x64xbf16>
    %cst = arith.constant dense<0.000000e+00> : vector<80x8xf32>
    %3 = tpu.matmul %2, %1, %cst {dimension_numbers = #tpu.dot_dimension_numbers<[1], [1], [0], [0], [0, 0, 1, 0], [], []>} : vector<80x64xbf16>, vector<8x64xbf16>, vector<80x8xf32> -> vector<80x8xf32>
    %4 = vector.extract_strided_slice %3 {offsets = [0, 0], sizes = [40, 8], strides = [1, 1]} : vector<80x8xf32> to vector<40x8xf32>
    %5 = vector.extract_strided_slice %3 {offsets = [40, 0], sizes = [40, 8], strides = [1, 1]} : vector<80x8xf32> to vector<40x8xf32>
    %6 = arith.mulf %4, %4 : vector<40x8xf32>
    %7 = arith.mulf %5, %5 : vector<40x8xf32>
    %8 = arith.addf %6, %7 : vector<40x8xf32>
    %cst_3 = arith.constant 1.000000e-10 : f32
    %9 = vector.broadcast %cst_3 : f32 to vector<40x8xf32>
    %10 = arith.addf %8, %9 : vector<40x8xf32>
    %11 = math.log %10 : vector<40x8xf32>
    %c0_4 = arith.constant 0 : index
    %c0_5 = arith.constant 0 : index
    %12 = vector.load %arg3[%c0_4, %c0_5] : memref<8x40xf32, #tpu.memory_space<vmem>>, vector<8x40xf32>
    %cst_6 = arith.constant dense<0.000000e+00> : vector<8x8xf32>
    %13 = tpu.matmul %12, %11, %cst_6 {dimension_numbers = #tpu.dot_dimension_numbers<[1], [0], [0], [1], [0, 0, 1, 1], [], []>} : vector<8x40xf32>, vector<40x8xf32>, vector<8x8xf32> -> vector<8x8xf32>
    %14 = tpu.iota {dimensions = array<i32: 0>} : vector<8x8xi32>
    %c4_i32 = arith.constant 4 : i32
    %15 = vector.broadcast %c4_i32 : i32 to vector<8x8xi32>
    %16 = arith.cmpi slt, %14, %15 : vector<8x8xi32>
    %cst_7 = arith.constant -1.000000e+30 : f32
    %17 = vector.broadcast %cst_7 : f32 to vector<8x8xf32>
    %18 = arith.select %16, %13, %17 : vector<8x8xi1>, vector<8x8xf32>
    %cst_8 = arith.constant dense<0xFF800000> : vector<8xf32>
    %19 = vector.multi_reduction <maximumf>, %18, %cst_8 [0] : vector<8x8xf32> to vector<8xf32>
    %20 = vector.shape_cast %19 : vector<8xf32> to vector<1x8xf32>
    %21 = vector.broadcast %20 : vector<1x8xf32> to vector<8x8xf32>
    %22 = arith.cmpf oge, %18, %21 : vector<8x8xf32>
    %23 = arith.sitofp %14 : vector<8x8xi32> to vector<8x8xf32>
    %cst_9 = arith.constant 8.000000e+00 : f32
    %24 = vector.broadcast %cst_9 : f32 to vector<8x8xf32>
    %25 = arith.select %22, %23, %24 : vector<8x8xi1>, vector<8x8xf32>
    %cst_10 = arith.constant dense<0x7F800000> : vector<8xf32>
    %26 = vector.multi_reduction <minimumf>, %25, %cst_10 [0] : vector<8x8xf32> to vector<8xf32>
    %27 = vector.shape_cast %26 : vector<8xf32> to vector<1x8xf32>
    %c0_11 = arith.constant 0 : index
    %c0_12 = arith.constant 0 : index
    %c0_13 = arith.constant 0 : index
    %28 = vector.load %arg4[%c0_11, %c0_12, %c0_13] : memref<1x1x8xf32, #tpu.memory_space<vmem>>, vector<1x1x8xf32>
    %29 = vector.shape_cast %28 : vector<1x1x8xf32> to vector<1x8xf32>
    %30 = vector.shape_cast %27 : vector<1x8xf32> to vector<1x1x8xf32>
    tpu.vector_store %arg4[%c0_11, %c0_12, %c0_13], %30 {strides = array<i32>} : memref<1x1x8xf32, #tpu.memory_space<vmem>>, vector<1x1x8xf32>,
    return
  }
  func.func @transform_0(%arg0: i32) -> (i32, i32) {
    %c0_i32 = arith.constant 0 : i32
    %c0_i32_0 = arith.constant 0 : i32
    return %arg0, %c0_i32 : i32, i32
  }
  func.func @transform_1(%arg0: i32) -> (i32, i32) {
    %c0_i32 = arith.constant 0 : i32
    %c0_i32_0 = arith.constant 0 : i32
    %c0_i32_1 = arith.constant 0 : i32
    return %c0_i32, %c0_i32_0 : i32, i32
  }
  func.func @transform_2(%arg0: i32) -> (i32, i32) {
    %c0_i32 = arith.constant 0 : i32
    %c0_i32_0 = arith.constant 0 : i32
    %c0_i32_1 = arith.constant 0 : i32
    return %c0_i32, %c0_i32_0 : i32, i32
  }
  func.func @transform_3(%arg0: i32) -> (i32, i32, i32) {
    %c0_i32 = arith.constant 0 : i32
    %c0_i32_0 = arith.constant 0 : i32
    %c0_i32_1 = arith.constant 0 : i32
    return %arg0, %c0_i32, %c0_i32_0 : i32, i32, i32
  }
}

</mosaic_0001>

<llo_original>
// kernel: tpu_custom_call.1
$region0: #{tpu_custom_call.1}
  #allocation0 [shape = 'u32[]', space=smem, size = 0x4, offset = 0x4, fixed_abs, tag = 'smem constant byte address 0x4 - core index']
  #allocation1 [shape = 'u32[144,128]{1,0:T(1,128)}', space=vmem, size = 0x12000, scoped, tag = 'internal scratch']
  %s0 = inlined_call_operand.vmem [shape: f32[16,64], index: 0, kind: input, shape index: {}]
  %s1 = inlined_call_operand.vmem [shape: bf16[80,64], index: 1, kind: input, shape index: {}]
  %s2 = inlined_call_operand.vmem [shape: f32[8,40], index: 2, kind: input, shape index: {}]
  %s3 = inlined_call_operand.hbm [shape: f32[2,1,8], index: 3, kind: output, shape index: {}]
  %s4 = sld [smem:[#allocation0]]
  $region45: #{tpu_custom_call.1} parent=0
    _
  %s6 = ssub.s32 1, %s4
  %s7 = scalar_select 0, %s6, %s4
  $region1: #{tpu_custom_call.1} parent=0
    #allocation2 [shape = 'u8[1024]{0}', space=vmem, size = 0x400, scoped, tag = 'output window, operand 0']
    #allocation3 [shape = 's32[2]{0}', space=sflag, size = 0x8, scoped, tag = 'scoped memory for tpu_custom_call.1']
    %8 = vsyncpa [#allocation3], 0
    %s9 = scalar_lea.sflag [#allocation3], 1
    %10 = vsyncpa %s9, 0
    loop: start=0, step=1, limit=4
    $region2: #{tpu_custom_call.1} parent=1 // loop_pre_header
      _
    $region3: #{tpu_custom_call.1} parent=1 // loop_header
      %s12 = sphi 0, %s16
      %p13 = scmp.ge.s32.totalorder %s12, 4
      %s22 = sphi 0, %s24
      %s25 = sphi 0, %s22
      %s26 = sphi 0, %s25
      %s42 = sphi 0, %s26
      %s46 = sphi 0, %s46
      %s48 = sphi 0, %s46
      %s49 = sphi 0, %s48
      %s63 = sphi 0, %s49
      %s67 = sphi 0, %s67
      %s69 = sphi 0, %s67
      %s70 = sphi 0, %s69
      %s84 = sphi 0, %s70
      %s90 = sphi 0, %s92
      %s93 = sphi 0, %s90
      %s94 = sphi 0, %s93
      %s110 = sphi 0, %s94
    $region4: #{tpu_custom_call.1} parent=1 // loop_header_branch
      %15 = sbr.rel (%p13) target = $region8
    $region5: #{tpu_custom_call.1} parent=1 // loop_body
      %s17 = ssub.s32 %s12, 1
      %s18 = ssub.s32 %s12, 2
      %s19 = sadd.s32 %s12, 1
      %s20 = ssub.s32 %s12, %s19
      %p21 = scmp.eq.s32.totalorder %s20, 0
      %s23 = sadd.s32 %s22, 1
      %s24 = scalar_select %p21, %s22, %s23
      %p27 = pneg %p21
      %p28 = scmp.eq.s32.totalorder %s12, 1
      %p29 = por %p27, %p28
      %p30 = scmp.ne.s32.totalorder %s22, %s25
      %p31 = scmp.eq.s32.totalorder %s12, 0
      %p32 = por %p30, %p31
      %p33 = scmp.ne.s32.totalorder %s22, %s25
      %p34 = scmp.eq.s32.totalorder %s17, 1
      %p35 = por %p33, %p34
      %p36 = scmp.ne.s32.totalorder %s25, %s26
      %p37 = scmp.eq.s32.totalorder %s17, 0
      %p38 = por %p36, %p37
      %p39 = scmp.ne.s32.totalorder %s25, %s26
      %p40 = scmp.eq.s32.totalorder %s18, 1
      %p41 = por %p39, %p40
      %p43 = scmp.ne.s32.totalorder %s26, %s42
      %p44 = scmp.eq.s32.totalorder %s18, 0
      %p45 = por %p43, %p44
      %s47 = sadd.s32 %s46, 1
      %p50 = scmp.eq.s32.totalorder %s12, 1
      %p51 = scmp.ne.s32.totalorder %s46, %s48
      %p52 = scmp.eq.s32.totalorder %s12, 0
      %p53 = por %p51, %p52
      %p54 = scmp.ne.s32.totalorder %s46, %s48
      %p55 = scmp.eq.s32.totalorder %s17, 1
      %p56 = por %p54, %p55
      %p57 = scmp.ne.s32.totalorder %s48, %s49
      %p58 = scmp.eq.s32.totalorder %s17, 0
      %p59 = por %p57, %p58
      %p60 = scmp.ne.s32.totalorder %s48, %s49
      %p61 = scmp.eq.s32.totalorder %s18, 1
      %p62 = por %p60, %p61
      %p64 = scmp.ne.s32.totalorder %s49, %s63
      %p65 = scmp.eq.s32.totalorder %s18, 0
      %p66 = por %p64, %p65
      %s68 = sadd.s32 %s67, 1
      %p71 = scmp.eq.s32.totalorder %s12, 1
      %p72 = scmp.ne.s32.totalorder %s67, %s69
      %p73 = scmp.eq.s32.totalorder %s12, 0
      %p74 = por %p72, %p73
      %p75 = scmp.ne.s32.totalorder %s67, %s69
      %p76 = scmp.eq.s32.totalorder %s17, 1
      %p77 = por %p75, %p76
      %p78 = scmp.ne.s32.totalorder %s69, %s70
      %p79 = scmp.eq.s32.totalorder %s17, 0
      %p80 = por %p78, %p79
      %p81 = scmp.ne.s32.totalorder %s69, %s70
      %p82 = scmp.eq.s32.totalorder %s18, 1
      %p83 = por %p81, %p82
      %p85 = scmp.ne.s32.totalorder %s70, %s84
      %p86 = scmp.eq.s32.totalorder %s18, 0
      %p87 = por %p85, %p86
      %s88 = ssub.s32 %s12, %s19
      %p89 = scmp.eq.s32.totalorder %s88, 0
      %s91 = sadd.s32 %s90, 1
      %s92 = scalar_select %p89, %s90, %s91
      %p95 = pneg %p89
      %p96 = scmp.eq.s32.totalorder %s12, 1
      %p97 = por %p95, %p96
      %p98 = scmp.ne.s32.totalorder %s90, %s93
      %p99 = scmp.eq.s32.totalorder %s12, 0
      %p100 = por %p98, %p99
      %p101 = scmp.ne.s32.totalorder %s90, %s93
      %p102 = scmp.eq.s32.totalorder %s17, 1
      %p103 = por %p101, %p102
      %p104 = scmp.ne.s32.totalorder %s93, %s94
      %p105 = scmp.eq.s32.totalorder %s17, 0
      %p106 = por %p104, %p105
      %p107 = scmp.ne.s32.totalorder %s93, %s94
      %p108 = scmp.eq.s32.totalorder %s18, 1
      %p109 = por %p107, %p108
      %p111 = scmp.ne.s32.totalorder %s94, %s110
      %p112 = scmp.eq.s32.totalorder %s18, 0
      %p113 = por %p111, %p112
      %p114 = scmp.le.s32.totalorder 1, %s12
      %p115 = scmp.lt.s32.totalorder %s12, 3
      %p116 = pnand %p114, %p115
      %p117 = pneg %p116
      // Predicated region
      $region9: #{tpu_custom_call.1} parent=5 // pred_check
        _
      $region10: #{tpu_custom_call.1} parent=5 // pred_check_branch
        %119 = sbr.rel (%p116) target = $region12
      $region11: #{tpu_custom_call.1} parent=5 // pred_region
        %s120 = ssub.s32 %s12, 1
        // Predicated region
        $region13: #{tpu_custom_call.1} parent=11 // pred_check
          %p121 = pneg %p59
        $region14: #{tpu_custom_call.1} parent=11 // pred_check_branch
          %123 = sbr.rel (%p121) target = $region16
        $region15: #{tpu_custom_call.1} parent=11 // pred_region
          _
        $region16: #{tpu_custom_call.1} parent=11 // pred_fallthru
          _
        // Predicated region
        $region17: #{tpu_custom_call.1} parent=11 // pred_check
          %p124 = pneg %p80
        $region18: #{tpu_custom_call.1} parent=11 // pred_check_branch
          %126 = sbr.rel (%p124) target = $region20
        $region19: #{tpu_custom_call.1} parent=11 // pred_region
          _
        $region20: #{tpu_custom_call.1} parent=11 // pred_fallthru
          _
      $region12: #{tpu_custom_call.1} parent=5 // pred_fallthru
        _
      %p127 = scmp.lt.s32.totalorder %s12, 2
      // Predicated region
      $region21: #{tpu_custom_call.1} parent=5 // pred_check
        %p128 = pneg %p127
      $region22: #{tpu_custom_call.1} parent=5 // pred_check_branch
        %130 = sbr.rel (%p128) target = $region24
      $region23: #{tpu_custom_call.1} parent=5 // pred_region
        // Predicated region
        $region25: #{tpu_custom_call.1} parent=23 // pred_check
          %p131 = pneg %p32
        $region26: #{tpu_custom_call.1} parent=23 // pred_check_branch
          %133 = sbr.rel (%p131) target = $region28
        $region27: #{tpu_custom_call.1} parent=23 // pred_region
          %p134 = scmp.lt.s32.totalorder %s12, 1
          %s135 = scalar_select %p134, %s12, 1
          %s136 = smul.addr %s135, 8
          %s137 = scalar_lea.vmem %s0, %s136
        $region28: #{tpu_custom_call.1} parent=23 // pred_fallthru
          _
      $region24: #{tpu_custom_call.1} parent=5 // pred_fallthru
        _
      %p138 = scmp.le.s32.totalorder 1, %s12
      %p139 = scmp.lt.s32.totalorder %s12, 3
      %p140 = pnand %p138, %p139
      %p141 = pneg %p140
      // Predicated region
      $region29: #{tpu_custom_call.1} parent=5 // pred_check
        _
      $region30: #{tpu_custom_call.1} parent=5 // pred_check_branch
        %143 = sbr.rel (%p140) target = $region32
      $region31: #{tpu_custom_call.1} parent=5 // pred_region
        %s144 = ssub.s32 %s12, 1
        %p145 = scmp.lt.s32.totalorder %s17, 1
        %s146 = scalar_select %p145, %s17, 1
        %s147 = smul.addr %s146, 8
        %s148 = scalar_lea.vmem %s0, %s147
        %p149 = pneg %p38
        %p150 = pneg %p35
        %p151 = pneg %p59
        %p152 = pneg %p56
        %p153 = pneg %p80
        %p154 = pneg %p77
        %p155 = pneg %p106
        %p156 = pneg %p103
        %s157 = sand.u32 %s93, 1
        %s158 = scalar_lea.sflag [#allocation3], %s157
        %s159 = sand.u32 %s93, 1
        %s160 = scalar_lea.vmem [#allocation2], %s159
        %p161 = scmp.lt.s32.totalorder %s17, 1
        %s162 = scalar_select %p161, %s17, 1
        %s163 = smul.addr %s162, 8
        %s164 = scalar_lea.vmem %s0, %s163
        %v166 = vld [vmem:[%s164] sm:$0xff]
        %v167 = vpack.c.bf16 %v166, %v166
        %v168 = vld [vmem:[%s1] sm:$0xf]
        %v169 = vld [vmem:[%s1 + $0x4] sm:$0xf]
        %v170 = vld [vmem:[%s1 + $0x8] sm:$0xf]
        %v171 = vld [vmem:[%s1 + $0xc] sm:$0xf]
        %v172 = vld [vmem:[%s1 + $0x10] sm:$0xf]
        %v173 = vld [vmem:[%s1 + $0x14] sm:$0xf]
        %v174 = vld [vmem:[%s1 + $0x18] sm:$0xf]
        %v175 = vld [vmem:[%s1 + $0x1c] sm:$0xf]
        %v176 = vld [vmem:[%s1 + $0x20] sm:$0xf]
        %v177 = vld [vmem:[%s1 + $0x24] sm:$0xf]
        %v188 = vunpack.c.l.b16 %v168
        %v189 = vunpack.c.l.b16 %v169
        %v190 = vunpack.c.l.b16 %v170
        %v191 = vunpack.c.l.b16 %v171
        %v192 = vunpack.c.l.b16 %v172
        %v193 = vunpack.c.l.b16 %v173
        %v194 = vunpack.c.l.b16 %v174
        %v195 = vunpack.c.l.b16 %v175
        %v196 = vunpack.c.l.b16 %v176
        %v197 = vunpack.c.l.b16 %v177
        %v198 = vpack.c.b16 %v189, %v188
        %v199 = vpack.c.b16 %v191, %v190
        %v200 = vpack.c.b16 %v193, %v192
        %v201 = vpack.c.b16 %v195, %v194
        %v202 = vpack.c.b16 %v197, %v196
        %vm203 = vcmask 523264
        %v205 = vsel %vm203, %v198, 0
        %v208 = vsel %vm203, %v199, 0
        %v211 = vsel %vm203, %v200, 0
        %v214 = vsel %vm203, %v201, 0
        %v217 = vsel %vm203, %v202, 0
        %v220 = vsel %vm203, %v167, 0
        %222 = vmatprep.subr.bf16.mxu0 0
        %223 = vmatpush1.bf16.xpose.msra.mxu0 %v220
        %224 = vmatprep.subr.bf16.mxu0 0
        %225 = vmatpush1.bf16.xpose.msra.mxu0 0
        %226 = vmatprep.subr.bf16.mxu0 0
        %227 = vmatpush1.bf16.xpose.msra.mxu0 0
        %228 = vmatprep.subr.bf16.mxu0 0
        %229 = vmatpush1.bf16.xpose.msra.mxu0 0
        %230 = vmatprep.subr.bf16.mxu0 0
        %231 = vmatpush1.bf16.xpose.msra.mxu0 0
        %232 = vmatprep.subr.bf16.mxu0 0
        %233 = vmatpush1.bf16.xpose.msra.mxu0 0
        %234 = vmatprep.subr.bf16.mxu0 0
        %235 = vmatpush1.bf16.xpose.msra.mxu0 0
        %236 = vmatprep.subr.bf16.mxu0 0
        %237 = vmatpush1.bf16.xpose.msra.mxu0 0
        %238 = vmatprep.subr.bf16.mxu0 0
        %239 = vmatpush1.bf16.xpose.msra.mxu0 0
        %240 = vmatprep.subr.bf16.mxu0 0
        %241 = vmatpush1.bf16.xpose.msra.mxu0 0
        %242 = vmatprep.subr.bf16.mxu0 0
        %243 = vmatpush1.bf16.xpose.msra.mxu0 0
        %244 = vmatprep.subr.bf16.mxu0 0
        %245 = vmatpush1.bf16.xpose.msra.mxu0 0
        %246 = vmatprep.subr.bf16.mxu0 0
        %247 = vmatpush1.bf16.xpose.msra.mxu0 0
        %248 = vmatprep.subr.bf16.mxu0 0
        %249 = vmatpush1.bf16.xpose.msra.mxu0 0
        %250 = vmatprep.subr.bf16.mxu0 0
        %251 = vmatpush1.bf16.xpose.msra.mxu0 0
        %252 = vmatprep.subr.bf16.mxu0 0
        %253 = vmatpush1.bf16.xpose.msra.mxu0 0
        %254 = vmatprep.mubr.bf16.mxu0 0
        %255 = vmatmul.mubr.bf16.gmra.mrb[0].mxu0 %v205
        %v256 = vpop.f32.mrb[0].mxu0
        %v257 = vadd.f32 0.0, %v256
        %v258 = vpop.f32.mrb[0].mxu0
        %v259 = vpop.f32.mrb[0].mxu0
        %v260 = vadd.f32 0.0, %v259
        %v261 = vpop.f32.mrb[0].mxu0
        %262 = vmatprep.mubr.bf16.mxu0 0
        %263 = vmatmul.mubr.bf16.gmra.mrb[0].mxu0 %v208
        %v264 = vpop.f32.mrb[0].mxu0
        %v265 = vadd.f32 0.0, %v264
        %v266 = vpop.f32.mrb[0].mxu0
        %v267 = vpop.f32.mrb[0].mxu0
        %v268 = vadd.f32 0.0, %v267
        %v269 = vpop.f32.mrb[0].mxu0
        %270 = vmatprep.mubr.bf16.mxu0 0
        %271 = vmatmul.mubr.bf16.gmra.mrb[0].mxu0 %v211
        %v272 = vpop.f32.mrb[0].mxu0
        %v273 = vadd.f32 0.0, %v272
        %v274 = vpop.f32.mrb[0].mxu0
        %v275 = vpop.f32.mrb[0].mxu0
        %v276 = vadd.f32 0.0, %v275
        %v277 = vpop.f32.mrb[0].mxu0
        %278 = vmatprep.mubr.bf16.mxu0 0
        %279 = vmatmul.mubr.bf16.gmra.mrb[0].mxu0 %v214
        %v280 = vpop.f32.mrb[0].mxu0
        %v281 = vadd.f32 0.0, %v280
        %v282 = vpop.f32.mrb[0].mxu0
        %v283 = vpop.f32.mrb[0].mxu0
        %v284 = vadd.f32 0.0, %v283
        %v285 = vpop.f32.mrb[0].mxu0
        %286 = vmatprep.mubr.bf16.mxu0 0
        %287 = vmatmul.mubr.bf16.gmra.mrb[0].mxu0 %v217
        %v288 = vpop.f32.mrb[0].mxu0
        %v289 = vadd.f32 0.0, %v288
        %v290 = vpop.f32.mrb[0].mxu0
        %v291 = vpop.f32.mrb[0].mxu0
        %v292 = vadd.f32 0.0, %v291
        %v293 = vpop.f32.mrb[0].mxu0
        %294 = vdwg.mxu0
        %v295 = vmul.f32 %v257, %v257
        %v296 = vmul.f32 %v260, %v260
        %v297 = vmul.f32 %v265, %v265
        %v298 = vmul.f32 %v268, %v268
        %v299 = vmul.f32 %v273, %v273
        %v300 = vmul.f32 %v276, %v276
        %v301 = vmul.f32 %v281, %v281
        %v302 = vmul.f32 %v284, %v284
        %v303 = vmul.f32 %v289, %v289
        %v304 = vmul.f32 %v292, %v292
        %v305 = vadd.f32 %v295, %v300
        %v306 = vadd.f32 %v296, %v301
        %v307 = vadd.f32 %v297, %v302
        %v308 = vadd.f32 %v298, %v303
        %v309 = vadd.f32 %v299, %v304
        %v310 = vadd.f32 %v305, 1e-10
        %v311 = vadd.f32 %v306, 1e-10
        %v312 = vadd.f32 %v307, 1e-10
        %v313 = vadd.f32 %v308, 1e-10
        %v314 = vadd.f32 %v309, 1e-10
        %v315 = vlog2.pop %v310
        %v316 = vmul.f32 %v315, 0.6931472
        %v317 = vlog2.pop %v311
        %v318 = vmul.f32 %v317, 0.6931472
        %v319 = vlog2.pop %v312
        %v320 = vmul.f32 %v319, 0.6931472
        %v321 = vlog2.pop %v313
        %v322 = vmul.f32 %v321, 0.6931472
        %v323 = vlog2.pop %v314
        %v324 = vmul.f32 %v323, 0.6931472
        %v325 = vld [vmem:[%s2] sm:$0xff]
        %vm326 = vcmask 326656
        %v328 = vsel %vm326, %v325, 0
        %330 = vmatprep.subr.mxu0 0.0
        %331 = vmatpush1.msra.mxu0 %v316
        %332 = vmatprep.subr.mxu0 0.0
        %333 = vmatpush1.msra.mxu0 %v318
        %334 = vmatprep.subr.mxu0 0.0
        %335 = vmatpush1.msra.mxu0 %v320
        %336 = vmatprep.subr.mxu0 0.0
        %337 = vmatpush1.msra.mxu0 %v322
        %338 = vmatprep.subr.mxu0 0.0
        %339 = vmatpush1.msra.mxu0 %v324
        %340 = vmatprep.subr.mxu0 0.0
        %341 = vmatpush1.msra.mxu0 0.0
        %342 = vmatprep.subr.mxu0 0.0
        %343 = vmatpush1.msra.mxu0 0.0
        %344 = vmatprep.subr.mxu0 0.0
        %345 = vmatpush1.msra.mxu0 0.0
        %346 = vmatprep.subr.mxu0 0.0
        %347 = vmatpush1.msra.mxu0 0.0
        %348 = vmatprep.subr.mxu0 0.0
        %349 = vmatpush1.msra.mxu0 0.0
        %350 = vmatprep.subr.mxu0 0.0
        %351 = vmatpush1.msra.mxu0 0.0
        %352 = vmatprep.subr.mxu0 0.0
        %353 = vmatpush1.msra.mxu0 0.0
        %354 = vmatprep.subr.mxu0 0.0
        %355 = vmatpush1.msra.mxu0 0.0
        %356 = vmatprep.subr.mxu0 0.0
        %357 = vmatpush1.msra.mxu0 0.0
        %358 = vmatprep.subr.mxu0 0.0
        %359 = vmatpush1.msra.mxu0 0.0
        %360 = vmatprep.subr.mxu0 0.0
        %361 = vmatpush1.msra.mxu0 0.0
        %362 = vmatprep.subr.mxu0 0.0
        %363 = vmatpush1.msra.mxu0 0.0
        %364 = vmatprep.subr.mxu0 0.0
        %365 = vmatpush1.msra.mxu0 0.0
        %366 = vmatprep.subr.mxu0 0.0
        %367 = vmatpush1.msra.mxu0 0.0
        %368 = vmatprep.subr.mxu0 0.0
        %369 = vmatpush1.msra.mxu0 0.0
        %370 = vmatprep.subr.mxu0 0.0
        %371 = vmatpush1.msra.mxu0 0.0
        %372 = vmatprep.subr.mxu0 0.0
        %373 = vmatpush1.msra.mxu0 0.0
        %374 = vmatprep.subr.mxu0 0.0
        %375 = vmatpush1.msra.mxu0 0.0
        %376 = vmatprep.subr.mxu0 0.0
        %377 = vmatpush1.msra.mxu0 0.0
        %378 = vmatprep.subr.mxu0 0.0
        %379 = vmatpush1.msra.mxu0 0.0
        %380 = vmatprep.subr.mxu0 0.0
        %381 = vmatpush1.msra.mxu0 0.0
        %382 = vmatprep.subr.mxu0 0.0
        %383 = vmatpush1.msra.mxu0 0.0
        %384 = vmatprep.subr.mxu0 0.0
        %385 = vmatpush1.msra.mxu0 0.0
        %386 = vmatprep.subr.mxu0 0.0
        %387 = vmatpush1.msra.mxu0 0.0
        %388 = vmatprep.subr.mxu0 0.0
        %389 = vmatpush1.msra.mxu0 0.0
        %390 = vmatprep.subr.mxu0 0.0
        %391 = vmatpush1.msra.mxu0 0.0
        %392 = vmatprep.subr.mxu0 0.0
        %393 = vmatpush1.msra.mxu0 0.0
        %394 = vmatprep.mubr.f32.mxu0 0.0
        %395 = vmatmul.mubr.f32.gmra.mrb[0].mxu0 %v328
        %v396 = vpop.f32.mrb[0].mxu0
        %v397 = vadd.f32 0.0, %v396
        %v398 = vpop.f32.mrb[0].mxu0
        %399 = vdwg.mxu0
        %v400 = vlaneseq
        %v401 = vshrl.u32 %v400, 7
        %vm402 = vcmp.lt.s32.totalorder %v401, 4
        %v403 = vsel %vm402, %v397, -1e+30
        %vm404 = vcmask 64512
        %v405 = vsel %vm404, %v403, -inf
        %v406 = vrot.slane %v405, 4
        %v407 = vmax.f32 %v405, %v406
        %v408 = vrot.slane %v407, 2
        %v409 = vmax.f32 %v407, %v408
        %v410 = vrot.slane %v409, 1
        %v411 = vmax.f32 %v409, %v410
        %vm412 = vcmp.ge.f32.partialorder %v403, %v411
        %v413 = vcvt.s32.f32 %v401
        %v414 = vsel %vm412, %v413, 8.0
        %v415 = vsel %vm404, %v414, inf
        %v416 = vrot.slane %v415, 4
        %v417 = vmin.f32 %v415, %v416
        %v418 = vrot.slane %v417, 2
        %v419 = vmin.f32 %v417, %v418
        %v420 = vrot.slane %v419, 1
        %v421 = vmin.f32 %v419, %v420
        %vm422 = vcmask 57344
        %423 = vst.msk [vmem:[%s160] sm:$0x1] %vm422, %v421
        %s424 = sand.u32 %s93, 1
        %s425 = scalar_lea.sflag [#allocation3], %s424
        %s426 = sand.u32 %s93, 1
        %s427 = scalar_lea.vmem [#allocation2], %s426
        // Predicated region
        $region33: #{tpu_custom_call.1} parent=31 // pred_check
          %p428 = pneg %p103
        $region34: #{tpu_custom_call.1} parent=31 // pred_check_branch
          %430 = sbr.rel (%p428) target = $region36
        $region35: #{tpu_custom_call.1} parent=31 // pred_region
          %s432 = ssub.s32 16, 16
          %433 = vsyncadd %s425, %s432
          %s434 = smul.addr %s17, 16
          %s435 = scalar_lea.hbm %s3, %s434
          %s437 = sshll.u32 %s427, 4
          %s438 = int_to_ptr.vmem [resolvable:$true] %s437
          %440 = dma.vmem_to_hbm [thread:$0]  %s438, 16, %s435, %s425
        $region36: #{tpu_custom_call.1} parent=31 // pred_fallthru
          _
      $region32: #{tpu_custom_call.1} parent=5 // pred_fallthru
        _
      %p441 = scmp.le.s32.totalorder 2, %s12
      // Predicated region
      $region37: #{tpu_custom_call.1} parent=5 // pred_check
        %p442 = pneg %p441
      $region38: #{tpu_custom_call.1} parent=5 // pred_check_branch
        %444 = sbr.rel (%p442) target = $region40
      $region39: #{tpu_custom_call.1} parent=5 // pred_region
        %s445 = ssub.s32 %s12, 2
        // Predicated region
        $region41: #{tpu_custom_call.1} parent=39 // pred_check
          %p446 = pneg %p109
        $region42: #{tpu_custom_call.1} parent=39 // pred_check_branch
          %448 = sbr.rel (%p446) target = $region44
        $region43: #{tpu_custom_call.1} parent=39 // pred_region
          %s449 = sand.u32 %s94, 1
          %s450 = scalar_lea.sflag [#allocation3], %s449
          %s451 = sand.u32 %s94, 1
          %s452 = scalar_lea.vmem [#allocation2], %s451
          %453 = dma.done %s450, 16
        $region44: #{tpu_custom_call.1} parent=39 // pred_fallthru
          _
      $region40: #{tpu_custom_call.1} parent=5 // pred_fallthru
        _
    $region6: #{tpu_custom_call.1} parent=1 // loop_footer
      %s16 = sadd.s32 1, %s12
    $region7: #{tpu_custom_call.1} parent=1 // loop_footer_branch
      %11 = sbr.rel target = $region3
    $region8: #{tpu_custom_call.1} parent=1 // loop_exit
      _
    %454 = vsyncpa [#allocation3], 1
    %s455 = scalar_lea.sflag [#allocation3], 1
    %456 = vsyncpa %s455, 1

</llo_original>
